<compile_context>
chip_gen: v5e
topology: v5e:2x2
jax: 0.10.0
libtpu: 0.0.40
codegen_flags: <defaults>
</compile_context>

<pallas_src>
import numpy as np
import jax
import jax.numpy as jnp
from jax.experimental import pallas as pl
from jax.experimental.pallas import tpu as pltpu

# ----------------------------- problem sizes ---------------------------------
B = 2            # batch
L = 4            # number of SSL transformer layers (original: 25)
T = 24           # SSL frames / sequence length     (original: ~207), mult of 8
FRAME = 20       # raw samples per frame (synthetic SSL front-end)
D = 64           # SSL feature dim                  (original: 1024)
E = 32           # args.emb_size / conformer dim    (original: 144)
LD = L * D       # 256 -> MXU N dim is a multiple of 128
NUM_CLASSES = 2  # fc5 output

_SELU_ALPHA = 1.6732632423543772
_SELU_SCALE = 1.0507009873554805
_BN_EPS = 1e-5


def _selu(x):
    return _SELU_SCALE * jnp.where(x > 0, x, _SELU_ALPHA * (jnp.exp(x) - 1.0))


# ------------------------------ fused kernel ----------------------------------
def fused_kernel(scalars_ref, frames_ref, wssl_ref, bssl_ref, w0_ref,
                 wll_ref, bll_ref, wpool_ref, w5t_ref, b5_ref, out_ref):
    # scalars (SMEM, f32[4]) = [fc0_b, bn_gamma, bn_beta, pool_b]
    fc0_b = scalars_ref[0]
    gamma = scalars_ref[1]
    beta = scalars_ref[2]
    pool_b = scalars_ref[3]

    # --- synthetic SSL front-end: ALL layers in ONE matmul -------------------
    # (B*T, FRAME) bf16 @ (FRAME, L*D) bf16 -> (B*T, L*D) f32
    z = jnp.dot(frames_ref[...], wssl_ref[...],
                preferred_element_type=jnp.float32)
    feat = jnp.tanh(z + bssl_ref[...])                           # (B*T, L*D)
    feat3 = feat.reshape(B, T, LD)                               # (B, T, L*D)

    # --- getAttenF: per-layer adaptive_avg_pool1d over T + fc0 + sigmoid gate,
    #     fused with the gate-weighted layer sum (LL hoisted out of the loop).
    pooled = jnp.mean(feat3, axis=1)                             # (B, L*D)
    w0 = w0_ref[...]                                             # (1, D)
    acc = jnp.zeros((B, T, D), jnp.float32)
    for l in range(L):                                           # static, L=4
        sl = slice(l * D, (l + 1) * D)
        logit = jnp.sum(pooled[:, sl] * w0, axis=-1,
                        keepdims=True) + fc0_b                   # (B, 1)
        gate = jax.nn.sigmoid(logit)                             # (B, 1)
        acc = acc + gate[:, :, None] * feat3[:, :, sl]           # (B, T, D)

    # --- LL: single (B*T, D) @ (D, E) matmul, f32 -----------------------------
    x = jnp.dot(acc.reshape(B * T, D), wll_ref[...],
                preferred_element_type=jnp.float32) + bll_ref[...]   # (B*T, E)

    # --- BatchNorm2d(1) (training-mode batch stats) + SELU --------------------
    mu = jnp.mean(x)
    dx = x - mu
    var = jnp.mean(dx * dx)                                      # mean sq. dev.
    h = _selu(dx * jax.lax.rsqrt(var + _BN_EPS) * gamma + beta)  # (B*T, E)
    h3 = h.reshape(B, T, E)

    # TODO(synk): 4x ConformerBlock(dim=144) definition not provided; identity.

    # --- attention_pool: Linear(E,1) (VPU dot) -> softmax over T -> pool ------
    scores = jnp.sum(h3 * wpool_ref[...], axis=-1,
                     keepdims=True) + pool_b                     # (B, T, 1)
    m = jnp.max(scores, axis=1, keepdims=True)
    ew = jnp.exp(scores - m)
    denom = jnp.sum(ew, axis=1, keepdims=True)
    attn = ew * pl.reciprocal(denom, approx=True)                # (B, T, 1)
    pooled_x = jnp.sum(attn * h3, axis=1)                        # (B, E)

    # --- fc5 on the VPU (broadcast-mul + lane reduce; no MXU for 2x32x2) ------
    prod = pooled_x[:, None, :] * w5t_ref[...][None, :, :]       # (B, C, E)
    out_ref[...] = jnp.sum(prod, axis=-1) + b5_ref[...]          # (B, C)


def fused_forward(scalars, frames, wssl, bssl, w0, wll, bll, wpool, w5t, b5):
    b2 = frames.shape[0] // T
    vmem = pl.BlockSpec(memory_space=pltpu.MemorySpace.VMEM)
    return pl.pallas_call(
        fused_kernel,
        out_shape=jax.ShapeDtypeStruct((b2, NUM_CLASSES), jnp.float32),
        in_specs=[
            pl.BlockSpec(memory_space=pltpu.MemorySpace.SMEM),   # scalars (4,)
            vmem,   # frames  (B*T, FRAME)  bf16
            vmem,   # ssl_w   (FRAME, L*D)  bf16
            vmem,   # ssl_b   (1, L*D)      f32
            vmem,   # fc0_w   (1, D)        f32
            vmem,   # LL_w    (D, E)        f32
            vmem,   # LL_b    (1, E)        f32
            vmem,   # pool_w  (1, E)        f32
            vmem,   # fc5_w^T (C, E)        f32
            vmem,   # fc5_b   (1, C)        f32
        ],
        out_specs=vmem,
    )(scalars, frames, wssl, bssl, w0, wll, bll, wpool, w5t, b5)


# ------------------------------- full forward ---------------------------------
def forward(x, params):
    # x: (B, S, 1) float32 waveform, S = T * FRAME
    xa = x[..., 0]                                               # x.squeeze(-1)
    b = xa.shape[0]
    # synthetic SSL framing; cast to bf16 ONCE outside the kernel
    frames = xa.reshape(b * T, FRAME).astype(jnp.bfloat16)

    # one-time layout prep (tiny ops, outside the kernel)
    wssl = jnp.transpose(params["ssl_w"], (1, 0, 2)).reshape(FRAME, LD)  # bf16
    bssl = params["ssl_b"].reshape(1, LD)
    scalars = jnp.stack([params["fc0_b"][0, 0], params["bn_gamma"][0, 0],
                         params["bn_beta"][0, 0], params["pool_b"][0, 0]]
                        ).astype(jnp.float32)                    # SMEM (4,)

    return fused_forward(scalars, frames, wssl, bssl,
                         params["fc0_w"], params["ll_w"], params["ll_b"],
                         params["pool_w"], params["fc5_wt"], params["fc5_b"])


# ------------------------- pure-JAX reference (layer-wise) --------------------
def forward_ref(x, params):
    xa = x[..., 0]
    b = xa.shape[0]
    frames = xa.reshape(b * T, FRAME).astype(jnp.bfloat16)
    layer_feats = []
    for l in range(L):
        z = jnp.dot(frames, params["ssl_w"][l],
                    preferred_element_type=jnp.float32) + params["ssl_b"][l]
        layer_feats.append(jnp.tanh(z).reshape(b, T, D))
    feats = jnp.stack(layer_feats, axis=1)                       # (b, L, T, D)

    pooled = jnp.mean(feats, axis=2)                             # (b, L, D)
    y0 = pooled @ params["fc0_w"][0] + params["fc0_b"][0, 0]     # (b, L)
    gates = jax.nn.sigmoid(y0)[:, :, None, None]
    full = jnp.sum(feats * gates, axis=1)                        # (b, T, D)

    xll = full.reshape(b * T, D) @ params["ll_w"] + params["ll_b"]

    mu = jnp.mean(xll)
    var = jnp.mean((xll - mu) ** 2)
    h = _selu((xll - mu) * jax.lax.rsqrt(var + _BN_EPS)
              * params["bn_gamma"][0, 0] + params["bn_beta"][0, 0])
    h3 = h.reshape(b, T, E)

    scores = (jnp.sum(h3 * params["pool_w"], axis=-1, keepdims=True)
              + params["pool_b"][0, 0])
    attn = jax.nn.softmax(scores, axis=1)
    pooled_x = jnp.sum(attn * h3, axis=1)                        # (b, E)
    return pooled_x @ params["fc5_wt"].T + params["fc5_b"]       # (b, 2)


def make_params(key):
    ks = jax.random.split(key, 12)
    return {
        # synthetic SSL front-end (bf16 weight stream, f32 accumulation on MXU)
        "ssl_w": (jax.random.normal(ks[0], (L, FRAME, D), jnp.float32)
                  / np.sqrt(FRAME)).astype(jnp.bfloat16),
        "ssl_b": 0.01 * jax.random.normal(ks[1], (L, 1, D), jnp.float32),
        # fc0: Linear(D, 1) — stored as a (1, D) row for a VPU dot
        "fc0_w": jax.random.normal(ks[2], (1, D), jnp.float32) / np.sqrt(D),
        "fc0_b": 0.1 * jax.random.normal(ks[3], (1, 1), jnp.float32),
        # LL: Linear(D, E) — transposed weight, f32 (correctness concern fix)
        "ll_w": jax.random.normal(ks[4], (D, E), jnp.float32) / np.sqrt(D),
        "ll_b": 0.01 * jax.random.normal(ks[5], (1, E), jnp.float32),
        # BatchNorm2d(1) affine params
        "bn_gamma": 1.0 + 0.1 * jax.random.normal(ks[6], (1, 1), jnp.float32),
        "bn_beta": 0.1 * jax.random.normal(ks[7], (1, 1), jnp.float32),
        # attention_pool: Linear(E, 1)
        "pool_w": jax.random.normal(ks[8], (1, E), jnp.float32) / np.sqrt(E),
        "pool_b": 0.1 * jax.random.normal(ks[9], (1, 1), jnp.float32),
        # fc5: Linear(E, 2) — stored transposed (C, E) for a VPU dot
        "fc5_wt": jax.random.normal(ks[10], (NUM_CLASSES, E), jnp.float32) / np.sqrt(E),
        "fc5_b": 0.1 * jax.random.normal(ks[11], (1, NUM_CLASSES), jnp.float32),
    }


if __name__ == "__main__":
    key = jax.random.PRNGKey(0)
    pkey, xkey = jax.random.split(key)
    params = make_params(pkey)
    x = jax.random.normal(xkey, (B, T * FRAME, 1), jnp.float32)  # (B, samples, 1)

    fwd = jax.jit(lambda inp: forward(inp, params))
    out = jax.block_until_ready(fwd(x))

    ref = jax.block_until_ready(jax.jit(lambda inp: forward_ref(inp, params))(x))

    assert out.shape == (B, NUM_CLASSES), out.shape
    assert out.dtype == jnp.float32
    assert bool(jnp.all(jnp.isfinite(out)))
    assert np.allclose(np.asarray(out), np.asarray(ref), atol=5e-2, rtol=5e-2), \
        (np.asarray(out), np.asarray(ref))
    print("KERNEL_OK")
</pallas_src>

<mosaic_0001>
module attributes {stable_mosaic.version = 11 : i64} {
  func.func @fused_kernel(%arg0: memref<4xf32, #tpu.memory_space<smem>>, %arg1: memref<48x20xbf16, #tpu.memory_space<vmem>>, %arg2: memref<20x256xbf16, #tpu.memory_space<vmem>>, %arg3: memref<1x256xf32, #tpu.memory_space<vmem>>, %arg4: memref<1x64xf32, #tpu.memory_space<vmem>>, %arg5: memref<64x32xf32, #tpu.memory_space<vmem>>, %arg6: memref<1x32xf32, #tpu.memory_space<vmem>>, %arg7: memref<1x32xf32, #tpu.memory_space<vmem>>, %arg8: memref<2x32xf32, #tpu.memory_space<vmem>>, %arg9: memref<1x2xf32, #tpu.memory_space<vmem>>, %arg10: memref<2x2xf32, #tpu.memory_space<vmem>>) attributes {dimension_semantics = [], scalar_prefetch = 0 : i64, scratch_operands = 0 : i64, tpu.core_type = #tpu.core_type<tc>} {
    %c0 = arith.constant 0 : index
    %0 = memref.load %arg0[%c0] : memref<4xf32, #tpu.memory_space<smem>>
    %c1 = arith.constant 1 : index
    %1 = memref.load %arg0[%c1] : memref<4xf32, #tpu.memory_space<smem>>
    %c2 = arith.constant 2 : index
    %2 = memref.load %arg0[%c2] : memref<4xf32, #tpu.memory_space<smem>>
    %c3 = arith.constant 3 : index
    %3 = memref.load %arg0[%c3] : memref<4xf32, #tpu.memory_space<smem>>
    %c0_0 = arith.constant 0 : index
    %c0_1 = arith.constant 0 : index
    %4 = vector.load %arg1[%c0_0, %c0_1] : memref<48x20xbf16, #tpu.memory_space<vmem>>, vector<48x20xbf16>
    %c0_2 = arith.constant 0 : index
    %c0_3 = arith.constant 0 : index
    %5 = vector.load %arg2[%c0_2, %c0_3] : memref<20x256xbf16, #tpu.memory_space<vmem>>, vector<20x256xbf16>
    %cst = arith.constant dense<0.000000e+00> : vector<48x256xf32>
    %6 = tpu.matmul %4, %5, %cst {dimension_numbers = #tpu.dot_dimension_numbers<[1], [0], [0], [1], [0, 0, 1, 1], [], []>} : vector<48x20xbf16>, vector<20x256xbf16>, vector<48x256xf32> -> vector<48x256xf32>
    %c0_4 = arith.constant 0 : index
    %c0_5 = arith.constant 0 : index
    %7 = vector.load %arg3[%c0_4, %c0_5] : memref<1x256xf32, #tpu.memory_space<vmem>>, vector<1x256xf32>
    %8 = vector.broadcast %7 : vector<1x256xf32> to vector<48x256xf32>
    %9 = arith.addf %6, %8 : vector<48x256xf32>
    %10 = math.tanh %9 : vector<48x256xf32>
    %11 = vector.shape_cast %10 : vector<48x256xf32> to vector<2x24x256xf32>
    %cst_6 = arith.constant dense<0.000000e+00> : vector<2x256xf32>
    %12 = vector.multi_reduction <add>, %11, %cst_6 [1] : vector<2x24x256xf32> to vector<2x256xf32>
    %cst_7 = arith.constant 2.400000e+01 : f32
    %13 = vector.broadcast %cst_7 : f32 to vector<2x256xf32>
    %14 = arith.divf %12, %13 : vector<2x256xf32>
    %c0_8 = arith.constant 0 : index
    %c0_9 = arith.constant 0 : index
    %15 = vector.load %arg4[%c0_8, %c0_9] : memref<1x64xf32, #tpu.memory_space<vmem>>, vector<1x64xf32>
    %cst_10 = arith.constant 0.000000e+00 : f32
    %16 = vector.broadcast %cst_10 : f32 to vector<2x24x64xf32>
    %17 = vector.extract_strided_slice %14 {offsets = [0, 0], sizes = [2, 64], strides = [1, 1]} : vector<2x256xf32> to vector<2x64xf32>
    %18 = vector.broadcast %15 : vector<1x64xf32> to vector<2x64xf32>
    %19 = arith.mulf %17, %18 : vector<2x64xf32>
    %cst_11 = arith.constant dense<0.000000e+00> : vector<2xf32>
    %20 = vector.multi_reduction <add>, %19, %cst_11 [1] : vector<2x64xf32> to vector<2xf32>
    %21 = vector.shape_cast %20 : vector<2xf32> to vector<2x1xf32>
    %22 = vector.broadcast %0 : f32 to vector<2x1xf32>
    %23 = arith.addf %21, %22 : vector<2x1xf32>
    %24 = arith.negf %23 : vector<2x1xf32>
    %25 = math.exp %24 : vector<2x1xf32>
    %cst_12 = arith.constant 1.000000e+00 : f32
    %26 = vector.broadcast %cst_12 : f32 to vector<2x1xf32>
    %27 = arith.addf %26, %25 : vector<2x1xf32>
    %28 = arith.divf %26, %27 : vector<2x1xf32>
    %29 = vector.shape_cast %28 : vector<2x1xf32> to vector<2x1x1xf32>
    %30 = vector.extract_strided_slice %11 {offsets = [0, 0, 0], sizes = [2, 24, 64], strides = [1, 1, 1]} : vector<2x24x256xf32> to vector<2x24x64xf32>
    %31 = vector.broadcast %29 : vector<2x1x1xf32> to vector<2x24x64xf32>
    %32 = arith.mulf %31, %30 : vector<2x24x64xf32>
    %33 = arith.addf %16, %32 : vector<2x24x64xf32>
    %34 = vector.extract_strided_slice %14 {offsets = [0, 64], sizes = [2, 64], strides = [1, 1]} : vector<2x256xf32> to vector<2x64xf32>
    %35 = vector.broadcast %15 : vector<1x64xf32> to vector<2x64xf32>
    %36 = arith.mulf %34, %35 : vector<2x64xf32>
    %cst_13 = arith.constant dense<0.000000e+00> : vector<2xf32>
    %37 = vector.multi_reduction <add>, %36, %cst_13 [1] : vector<2x64xf32> to vector<2xf32>
    %38 = vector.shape_cast %37 : vector<2xf32> to vector<2x1xf32>
    %39 = vector.broadcast %0 : f32 to vector<2x1xf32>
    %40 = arith.addf %38, %39 : vector<2x1xf32>
    %41 = arith.negf %40 : vector<2x1xf32>
    %42 = math.exp %41 : vector<2x1xf32>
    %cst_14 = arith.constant 1.000000e+00 : f32
    %43 = vector.broadcast %cst_14 : f32 to vector<2x1xf32>
    %44 = arith.addf %43, %42 : vector<2x1xf32>
    %45 = arith.divf %43, %44 : vector<2x1xf32>
    %46 = vector.shape_cast %45 : vector<2x1xf32> to vector<2x1x1xf32>
    %47 = vector.extract_strided_slice %11 {offsets = [0, 0, 64], sizes = [2, 24, 64], strides = [1, 1, 1]} : vector<2x24x256xf32> to vector<2x24x64xf32>
    %48 = vector.broadcast %46 : vector<2x1x1xf32> to vector<2x24x64xf32>
    %49 = arith.mulf %48, %47 : vector<2x24x64xf32>
    %50 = arith.addf %33, %49 : vector<2x24x64xf32>
    %51 = vector.extract_strided_slice %14 {offsets = [0, 128], sizes = [2, 64], strides = [1, 1]} : vector<2x256xf32> to vector<2x64xf32>
    %52 = vector.broadcast %15 : vector<1x64xf32> to vector<2x64xf32>
    %53 = arith.mulf %51, %52 : vector<2x64xf32>
    %cst_15 = arith.constant dense<0.000000e+00> : vector<2xf32>
    %54 = vector.multi_reduction <add>, %53, %cst_15 [1] : vector<2x64xf32> to vector<2xf32>
    %55 = vector.shape_cast %54 : vector<2xf32> to vector<2x1xf32>
    %56 = vector.broadcast %0 : f32 to vector<2x1xf32>
    %57 = arith.addf %55, %56 : vector<2x1xf32>
    %58 = arith.negf %57 : vector<2x1xf32>
    %59 = math.exp %58 : vector<2x1xf32>
    %cst_16 = arith.constant 1.000000e+00 : f32
    %60 = vector.broadcast %cst_16 : f32 to vector<2x1xf32>
    %61 = arith.addf %60, %59 : vector<2x1xf32>
    %62 = arith.divf %60, %61 : vector<2x1xf32>
    %63 = vector.shape_cast %62 : vector<2x1xf32> to vector<2x1x1xf32>
    %64 = vector.extract_strided_slice %11 {offsets = [0, 0, 128], sizes = [2, 24, 64], strides = [1, 1, 1]} : vector<2x24x256xf32> to vector<2x24x64xf32>
    %65 = vector.broadcast %63 : vector<2x1x1xf32> to vector<2x24x64xf32>
    %66 = arith.mulf %65, %64 : vector<2x24x64xf32>
    %67 = arith.addf %50, %66 : vector<2x24x64xf32>
    %68 = vector.extract_strided_slice %14 {offsets = [0, 192], sizes = [2, 64], strides = [1, 1]} : vector<2x256xf32> to vector<2x64xf32>
    %69 = vector.broadcast %15 : vector<1x64xf32> to vector<2x64xf32>
    %70 = arith.mulf %68, %69 : vector<2x64xf32>
    %cst_17 = arith.constant dense<0.000000e+00> : vector<2xf32>
    %71 = vector.multi_reduction <add>, %70, %cst_17 [1] : vector<2x64xf32> to vector<2xf32>
    %72 = vector.shape_cast %71 : vector<2xf32> to vector<2x1xf32>
    %73 = vector.broadcast %0 : f32 to vector<2x1xf32>
    %74 = arith.addf %72, %73 : vector<2x1xf32>
    %75 = arith.negf %74 : vector<2x1xf32>
    %76 = math.exp %75 : vector<2x1xf32>
    %cst_18 = arith.constant 1.000000e+00 : f32
    %77 = vector.broadcast %cst_18 : f32 to vector<2x1xf32>
    %78 = arith.addf %77, %76 : vector<2x1xf32>
    %79 = arith.divf %77, %78 : vector<2x1xf32>
    %80 = vector.shape_cast %79 : vector<2x1xf32> to vector<2x1x1xf32>
    %81 = vector.extract_strided_slice %11 {offsets = [0, 0, 192], sizes = [2, 24, 64], strides = [1, 1, 1]} : vector<2x24x256xf32> to vector<2x24x64xf32>
    %82 = vector.broadcast %80 : vector<2x1x1xf32> to vector<2x24x64xf32>
    %83 = arith.mulf %82, %81 : vector<2x24x64xf32>
    %84 = arith.addf %67, %83 : vector<2x24x64xf32>
    %85 = vector.shape_cast %84 : vector<2x24x64xf32> to vector<48x64xf32>
    %c0_19 = arith.constant 0 : index
    %c0_20 = arith.constant 0 : index
    %86 = vector.load %arg5[%c0_19, %c0_20] : memref<64x32xf32, #tpu.memory_space<vmem>>, vector<64x32xf32>
    %cst_21 = arith.constant dense<0.000000e+00> : vector<48x32xf32>
    %87 = tpu.matmul %85, %86, %cst_21 {dimension_numbers = #tpu.dot_dimension_numbers<[1], [0], [0], [1], [0, 0, 1, 1], [], []>} : vector<48x64xf32>, vector<64x32xf32>, vector<48x32xf32> -> vector<48x32xf32>
    %c0_22 = arith.constant 0 : index
    %c0_23 = arith.constant 0 : index
    %88 = vector.load %arg6[%c0_22, %c0_23] : memref<1x32xf32, #tpu.memory_space<vmem>>, vector<1x32xf32>
    %89 = vector.broadcast %88 : vector<1x32xf32> to vector<48x32xf32>
    %90 = arith.addf %87, %89 : vector<48x32xf32>
    %91 = vector.shape_cast %90 : vector<48x32xf32> to vector<1x48x32xf32>
    %cst_24 = arith.constant dense<0.000000e+00> : vector<1xf32>
    %92 = vector.multi_reduction <add>, %91, %cst_24 [1, 2] : vector<1x48x32xf32> to vector<1xf32>
    %93 = vector.shape_cast %92 : vector<1xf32> to vector<1x1x1xf32>
    %94 = vector.extract %93[0, 0, 0] : f32 from vector<1x1x1xf32>
    %cst_25 = arith.constant 1.536000e+03 : f32
    %95 = arith.divf %94, %cst_25 : f32
    %96 = vector.broadcast %95 : f32 to vector<48x32xf32>
    %97 = arith.subf %90, %96 : vector<48x32xf32>
    %98 = arith.mulf %97, %97 : vector<48x32xf32>
    %99 = vector.shape_cast %98 : vector<48x32xf32> to vector<1x48x32xf32>
    %cst_26 = arith.constant dense<0.000000e+00> : vector<1xf32>
    %100 = vector.multi_reduction <add>, %99, %cst_26 [1, 2] : vector<1x48x32xf32> to vector<1xf32>
    %101 = vector.shape_cast %100 : vector<1xf32> to vector<1x1x1xf32>
    %102 = vector.extract %101[0, 0, 0] : f32 from vector<1x1x1xf32>
    %cst_27 = arith.constant 1.536000e+03 : f32
    %103 = arith.divf %102, %cst_27 : f32
    %cst_28 = arith.constant 9.99999974E-6 : f32
    %104 = arith.addf %103, %cst_28 : f32
    %105 = math.rsqrt %104 : f32
    %106 = vector.broadcast %105 : f32 to vector<48x32xf32>
    %107 = arith.mulf %97, %106 : vector<48x32xf32>
    %108 = vector.broadcast %1 : f32 to vector<48x32xf32>
    %109 = arith.mulf %107, %108 : vector<48x32xf32>
    %110 = vector.broadcast %2 : f32 to vector<48x32xf32>
    %111 = arith.addf %109, %110 : vector<48x32xf32>
    %cst_29 = arith.constant 0.000000e+00 : f32
    %112 = vector.broadcast %cst_29 : f32 to vector<48x32xf32>
    %113 = arith.cmpf ogt, %111, %112 : vector<48x32xf32>
    %114 = math.exp %111 : vector<48x32xf32>
    %cst_30 = arith.constant 1.000000e+00 : f32
    %115 = vector.broadcast %cst_30 : f32 to vector<48x32xf32>
    %116 = arith.subf %114, %115 : vector<48x32xf32>
    %cst_31 = arith.constant 1.67326319 : f32
    %117 = vector.broadcast %cst_31 : f32 to vector<48x32xf32>
    %118 = arith.mulf %117, %116 : vector<48x32xf32>
    %119 = arith.select %113, %111, %118 : vector<48x32xi1>, vector<48x32xf32>
    %cst_32 = arith.constant 1.05070102 : f32
    %120 = vector.broadcast %cst_32 : f32 to vector<48x32xf32>
    %121 = arith.mulf %120, %119 : vector<48x32xf32>
    %122 = vector.shape_cast %121 : vector<48x32xf32> to vector<2x24x32xf32>
    %c0_33 = arith.constant 0 : index
    %c0_34 = arith.constant 0 : index
    %123 = vector.load %arg7[%c0_33, %c0_34] : memref<1x32xf32, #tpu.memory_space<vmem>>, vector<1x32xf32>
    %124 = vector.shape_cast %123 : vector<1x32xf32> to vector<1x1x32xf32>
    %125 = vector.broadcast %124 : vector<1x1x32xf32> to vector<2x24x32xf32>
    %126 = arith.mulf %122, %125 : vector<2x24x32xf32>
    %cst_35 = arith.constant dense<0.000000e+00> : vector<2x24xf32>
    %127 = vector.multi_reduction <add>, %126, %cst_35 [2] : vector<2x24x32xf32> to vector<2x24xf32>
    %128 = vector.shape_cast %127 : vector<2x24xf32> to vector<2x24x1xf32>
    %129 = vector.broadcast %3 : f32 to vector<2x24x1xf32>
    %130 = arith.addf %128, %129 : vector<2x24x1xf32>
    %cst_36 = arith.constant dense<0xFF800000> : vector<2x1xf32>
    %131 = vector.multi_reduction <maximumf>, %130, %cst_36 [1] : vector<2x24x1xf32> to vector<2x1xf32>
    %132 = vector.shape_cast %131 : vector<2x1xf32> to vector<2x1x1xf32>
    %133 = vector.broadcast %132 : vector<2x1x1xf32> to vector<2x24x1xf32>
    %134 = arith.subf %130, %133 : vector<2x24x1xf32>
    %135 = math.exp %134 : vector<2x24x1xf32>
    %cst_37 = arith.constant dense<0.000000e+00> : vector<2x1xf32>
    %136 = vector.multi_reduction <add>, %135, %cst_37 [1] : vector<2x24x1xf32> to vector<2x1xf32>
    %137 = vector.shape_cast %136 : vector<2x1xf32> to vector<2x1x1xf32>
    %138 = tpu.reciprocal %137 {approx = true} : vector<2x1x1xf32> -> vector<2x1x1xf32>
    %139 = vector.broadcast %138 : vector<2x1x1xf32> to vector<2x24x1xf32>
    %140 = arith.mulf %135, %139 : vector<2x24x1xf32>
    %141 = vector.broadcast %140 : vector<2x24x1xf32> to vector<2x24x32xf32>
    %142 = arith.mulf %141, %122 : vector<2x24x32xf32>
    %cst_38 = arith.constant dense<0.000000e+00> : vector<2x32xf32>
    %143 = vector.multi_reduction <add>, %142, %cst_38 [1] : vector<2x24x32xf32> to vector<2x32xf32>
    %144 = vector.shape_cast %143 : vector<2x32xf32> to vector<2x1x32xf32>
    %c0_39 = arith.constant 0 : index
    %c0_40 = arith.constant 0 : index
    %145 = vector.load %arg8[%c0_39, %c0_40] : memref<2x32xf32, #tpu.memory_space<vmem>>, vector<2x32xf32>
    %146 = vector.shape_cast %145 : vector<2x32xf32> to vector<1x2x32xf32>
    %147 = vector.broadcast %144 : vector<2x1x32xf32> to vector<2x2x32xf32>
    %148 = vector.broadcast %146 : vector<1x2x32xf32> to vector<2x2x32xf32>
    %149 = arith.mulf %147, %148 : vector<2x2x32xf32>
    %cst_41 = arith.constant dense<0.000000e+00> : vector<2x2xf32>
    %150 = vector.multi_reduction <add>, %149, %cst_41 [2] : vector<2x2x32xf32> to vector<2x2xf32>
    %c0_42 = arith.constant 0 : index
    %c0_43 = arith.constant 0 : index
    %151 = vector.load %arg9[%c0_42, %c0_43] : memref<1x2xf32, #tpu.memory_space<vmem>>, vector<1x2xf32>
    %152 = vector.broadcast %151 : vector<1x2xf32> to vector<2x2xf32>
    %153 = arith.addf %150, %152 : vector<2x2xf32>
    %c0_44 = arith.constant 0 : index
    %c0_45 = arith.constant 0 : index
    %154 = vector.load %arg10[%c0_44, %c0_45] : memref<2x2xf32, #tpu.memory_space<vmem>>, vector<2x2xf32>
    tpu.vector_store %arg10[%c0_44, %c0_45], %153 {strides = array<i32>} : memref<2x2xf32, #tpu.memory_space<vmem>>, vector<2x2xf32>,
    return
  }
}

</mosaic_0001>

<llo_original>
// kernel: _lambda_.1
$region0: #{_lambda_.1}
  #allocation0 [shape = 'u32[]', space=smem, size = 0x4, offset = 0x4, fixed_abs, tag = 'smem constant byte address 0x4 - core index']
  #allocation1 [shape = 'u32[72,128]{1,0:T(1,128)}', space=vmem, size = 0x9000, scoped, tag = 'internal scratch']
  %s0 = inlined_call_operand.vmem [shape: f32[4], index: 0, kind: input, shape index: {}]
  %s1 = inlined_call_operand.vmem [shape: bf16[48,20], index: 1, kind: input, shape index: {}]
  %s2 = inlined_call_operand.vmem [shape: bf16[20,256], index: 2, kind: input, shape index: {}]
  %s3 = inlined_call_operand.vmem [shape: f32[1,256], index: 3, kind: input, shape index: {}]
  %s4 = inlined_call_operand.vmem [shape: f32[1,64], index: 4, kind: input, shape index: {}]
  %s5 = inlined_call_operand.hbm [shape: f32[64,32], index: 5, kind: input, shape index: {}]
  %s6 = inlined_call_operand.vmem [shape: f32[1,32], index: 6, kind: input, shape index: {}]
  %s7 = inlined_call_operand.vmem [shape: f32[1,32], index: 7, kind: input, shape index: {}]
  %s8 = inlined_call_operand.vmem [shape: f32[2,32], index: 8, kind: input, shape index: {}]
  %s9 = inlined_call_operand.vmem [shape: f32[1,2], index: 9, kind: input, shape index: {}]
  %s10 = inlined_call_operand.hbm [shape: f32[2,2], index: 10, kind: output, shape index: {}]
  %s11 = sld [smem:[#allocation0]]
  $region58: #{_lambda_.1} parent=0
    _
  %s13 = ssub.s32 1, %s11
  %s14 = scalar_select 0, %s13, %s11
  $region1: #{_lambda_.1} parent=0
    #allocation2 [shape = 'u8[512]{0}', space=smem, size = 0x200, scoped, tag = 'input window, operand 0, single buffered']
    #allocation3 [shape = 's32[1]{0}', space=sflag, size = 0x4, scoped, tag = 'scoped memory for _lambda_.1']
    #allocation4 [shape = 's32[1]{0}', space=sflag, size = 0x4, scoped, tag = 'scoped memory for _lambda_.1']
    #allocation5 [shape = 's32[1]{0}', space=sflag, size = 0x4, scoped, tag = 'scoped memory for _lambda_.1']
    #allocation6 [shape = 'u8[32768]{0}', space=vmem, size = 0x8000, scoped, tag = 'input window, operand 5, single buffered']
    #allocation7 [shape = 'u8[1024]{0}', space=vmem, size = 0x400, scoped, tag = 'output window, operand 0, single buffered']
    %15 = vsyncpa [#allocation5], 0
    %16 = vsyncpa [#allocation3], 0
    %17 = vsyncpa [#allocation4], 0
    // Predicated region
    $region2: #{_lambda_.1} parent=1 // pred_check
      _
    $region3: #{_lambda_.1} parent=1 // pred_check_branch
      %19 = sbr.rel (0) target = $region5
    $region4: #{_lambda_.1} parent=1 // pred_region
      %21 = vsyncadd [#allocation5], 0
      %s23 = sshll.u32 %s0, 4
      %s24 = int_to_ptr.vmem [resolvable:$true] %s23
      %26 = dma.vmem_to_smem %s24, 16, [#allocation2], [#allocation5]
    $region5: #{_lambda_.1} parent=1 // pred_fallthru
      _
    // Predicated region
    $region6: #{_lambda_.1} parent=1 // pred_check
      _
    $region7: #{_lambda_.1} parent=1 // pred_check_branch
      %28 = sbr.rel (0) target = $region9
    $region8: #{_lambda_.1} parent=1 // pred_region
      _
    $region9: #{_lambda_.1} parent=1 // pred_fallthru
      _
    // Predicated region
    $region10: #{_lambda_.1} parent=1 // pred_check
      _
    $region11: #{_lambda_.1} parent=1 // pred_check_branch
      %30 = sbr.rel (0) target = $region13
    $region12: #{_lambda_.1} parent=1 // pred_region
      _
    $region13: #{_lambda_.1} parent=1 // pred_fallthru
      _
    // Predicated region
    $region14: #{_lambda_.1} parent=1 // pred_check
      _
    $region15: #{_lambda_.1} parent=1 // pred_check_branch
      %32 = sbr.rel (0) target = $region17
    $region16: #{_lambda_.1} parent=1 // pred_region
      _
    $region17: #{_lambda_.1} parent=1 // pred_fallthru
      _
    // Predicated region
    $region18: #{_lambda_.1} parent=1 // pred_check
      _
    $region19: #{_lambda_.1} parent=1 // pred_check_branch
      %34 = sbr.rel (0) target = $region21
    $region20: #{_lambda_.1} parent=1 // pred_region
      _
    $region21: #{_lambda_.1} parent=1 // pred_fallthru
      _
    // Predicated region
    $region22: #{_lambda_.1} parent=1 // pred_check
      _
    $region23: #{_lambda_.1} parent=1 // pred_check_branch
      %36 = sbr.rel (0) target = $region25
    $region24: #{_lambda_.1} parent=1 // pred_region
      %38 = vsyncadd [#allocation3], 0
      %s39 = sshll.u32 %s5, 4
      %s40 = int_to_ptr.hbm [resolvable:$true] %s39
      %s41 = sshll.u32 [#allocation6], 4
      %s42 = int_to_ptr.vmem [resolvable:$true] %s41
      %47 = dma.hbm_to_vmem [thread:$0]  %s40, 1024, %s42, [#allocation3], 128, 128, 8
    $region25: #{_lambda_.1} parent=1 // pred_fallthru
      _
    // Predicated region
    $region26: #{_lambda_.1} parent=1 // pred_check
      _
    $region27: #{_lambda_.1} parent=1 // pred_check_branch
      %49 = sbr.rel (0) target = $region29
    $region28: #{_lambda_.1} parent=1 // pred_region
      _
    $region29: #{_lambda_.1} parent=1 // pred_fallthru
      _
    // Predicated region
    $region30: #{_lambda_.1} parent=1 // pred_check
      _
    $region31: #{_lambda_.1} parent=1 // pred_check_branch
      %51 = sbr.rel (0) target = $region33
    $region32: #{_lambda_.1} parent=1 // pred_region
      _
    $region33: #{_lambda_.1} parent=1 // pred_fallthru
      _
    // Predicated region
    $region34: #{_lambda_.1} parent=1 // pred_check
      _
    $region35: #{_lambda_.1} parent=1 // pred_check_branch
      %53 = sbr.rel (0) target = $region37
    $region36: #{_lambda_.1} parent=1 // pred_region
      _
    $region37: #{_lambda_.1} parent=1 // pred_fallthru
      _
    // Predicated region
    $region38: #{_lambda_.1} parent=1 // pred_check
      _
    $region39: #{_lambda_.1} parent=1 // pred_check_branch
      %55 = sbr.rel (0) target = $region41
    $region40: #{_lambda_.1} parent=1 // pred_region
      _
    $region41: #{_lambda_.1} parent=1 // pred_fallthru
      _
    // Predicated region
    $region42: #{_lambda_.1} parent=1 // pred_check
      _
    $region43: #{_lambda_.1} parent=1 // pred_check_branch
      %57 = sbr.rel (0) target = $region45
    $region44: #{_lambda_.1} parent=1 // pred_region
      %59 = dma.done [#allocation5], 16
    $region45: #{_lambda_.1} parent=1 // pred_fallthru
      _
    // Predicated region
    $region46: #{_lambda_.1} parent=1 // pred_check
      _
    $region47: #{_lambda_.1} parent=1 // pred_check_branch
      %61 = sbr.rel (0) target = $region49
    $region48: #{_lambda_.1} parent=1 // pred_region
      %63 = dma.done [#allocation3], 1024
    $region49: #{_lambda_.1} parent=1 // pred_fallthru
      _
    %64 = sfence
    %s66 = sld [smem:[#allocation2]]
    %s67 = sld [smem:[#allocation2 + $0x1]]
    %s68 = sld [smem:[#allocation2 + $0x2]]
    %s69 = sld [smem:[#allocation2 + $0x3]]
    %v70 = vld [vmem:[%s1] sm:$0xf]
    %v71 = vld [vmem:[%s1 + $0x4] sm:$0xf]
    %v72 = vld [vmem:[%s1 + $0x8] sm:$0xf]
    %v73 = vld [vmem:[%s1 + $0xc] sm:$0xf]
    %v74 = vld [vmem:[%s1 + $0x10] sm:$0xf]
    %v75 = vld [vmem:[%s1 + $0x14] sm:$0xf]
    %v76 = vld [vmem:[%s2] sm:$0xff]
    %v77 = vld [vmem:[%s2 + $0x8] sm:$0xff]
    %v78 = vld [vmem:[%s2 + $0x10] sm:$0x33]
    %v79 = vld [vmem:[%s3] sm:$0x3]
    %v81 = vperm.slane %v79, 0
    %v82 = vperm.slane %v79, 1
    %v91 = vunpack.c.l.b16 %v70
    %v92 = vunpack.c.l.b16 %v71
    %v93 = vunpack.c.l.b16 %v72
    %v94 = vunpack.c.l.b16 %v73
    %v95 = vunpack.c.l.b16 %v74
    %v96 = vunpack.c.l.b16 %v75
    %v97 = vpack.c.b16 %v92, %v91
    %v98 = vpack.c.b16 %v94, %v93
    %v99 = vpack.c.b16 %v96, %v95
    %v103 = vunpack.c.l.b16 %v76
    %v104 = vunpack.c.h.b16 %v76
    %v105 = vunpack.c.l.b16 %v77
    %v106 = vunpack.c.h.b16 %v77
    %v107 = vunpack.c.l.b16 %v78
    %v108 = vunpack.c.h.b16 %v78
    %v109 = vpack.c.b16 %v105, %v103
    %v110 = vpack.c.b16 %v106, %v104
    %v111 = vpack.c.b16 %v107, %v107
    %v112 = vpack.c.b16 %v108, %v108
    %vm115 = vcmask 162816
    %v117 = vsel %vm115, %v97, 0
    %v120 = vsel %vm115, %v98, 0
    %v123 = vsel %vm115, %v99, 0
    %vm125 = vcmask 1041408
    %v127 = vsel %vm125, %v111, 0
    %v130 = vsel %vm125, %v112, 0
    %132 = vmatpush.bf16.msra.mxu0 0
    %133 = vmatpush.bf16.msra.mxu0 0
    %134 = vmatpush.bf16.msra.mxu0 0
    %135 = vmatpush.bf16.msra.mxu0 0
    %136 = vmatpush.bf16.msra.mxu0 0
    %137 = vmatpush.bf16.msra.mxu0 0
    %138 = vmatpush.bf16.msra.mxu0 %v127
    %139 = vmatpush.bf16.msra.mxu0 %v109
    %140 = vmatmul.bf16.gmra.mxu0 %v117
    %v141 = vpop.f32.mrf.mxu0
    %v142 = vadd.f32 %v81, %v141
    %v143 = vpop.f32.mrf.mxu0
    %v144 = vadd.f32 %v81, %v143
    %145 = vmatmul.bf16.gmra.mxu0 %v120
    %v146 = vpop.f32.mrf.mxu0
    %v147 = vadd.f32 %v81, %v146
    %v148 = vpop.f32.mrf.mxu0
    %v149 = vadd.f32 %v81, %v148
    %150 = vmatmul.bf16.gmra.mxu0 %v123
    %v151 = vpop.f32.mrf.mxu0
    %v152 = vadd.f32 %v81, %v151
    %v153 = vpop.f32.mrf.mxu0
    %v154 = vadd.f32 %v81, %v153
    %155 = vdwg.mxu0
    %156 = vmatpush.bf16.msra.mxu0 0
    %157 = vmatpush.bf16.msra.mxu0 0
    %158 = vmatpush.bf16.msra.mxu0 0
    %159 = vmatpush.bf16.msra.mxu0 0
    %160 = vmatpush.bf16.msra.mxu0 0
    %161 = vmatpush.bf16.msra.mxu0 0
    %162 = vmatpush.bf16.msra.mxu0 %v130
    %163 = vmatpush.bf16.msra.mxu0 %v110
    %164 = vmatmul.bf16.gmra.mxu0 %v117
    %v165 = vpop.f32.mrf.mxu0
    %v166 = vadd.f32 %v82, %v165
    %v167 = vpop.f32.mrf.mxu0
    %v168 = vadd.f32 %v82, %v167
    %169 = vmatmul.bf16.gmra.mxu0 %v120
    %v170 = vpop.f32.mrf.mxu0
    %v171 = vadd.f32 %v82, %v170
    %v172 = vpop.f32.mrf.mxu0
    %v173 = vadd.f32 %v82, %v172
    %174 = vmatmul.bf16.gmra.mxu0 %v123
    %v175 = vpop.f32.mrf.mxu0
    %v176 = vadd.f32 %v82, %v175
    %v177 = vpop.f32.mrf.mxu0
    %v178 = vadd.f32 %v82, %v177
    %179 = vdwg.mxu0
    %v180 = vtanh.pop %v142
    %v181 = vtanh.pop %v166
    %v182 = vtanh.pop %v144
    %v183 = vtanh.pop %v168
    %v184 = vtanh.pop %v147
    %v185 = vtanh.pop %v171
    %v186 = vtanh.pop %v149
    %v187 = vtanh.pop %v173
    %v188 = vtanh.pop %v152
    %v189 = vtanh.pop %v176
    %v190 = vtanh.pop %v154
    %v191 = vtanh.pop %v178
    %v192 = vadd.f32 %v180, %v182
    %v193 = vadd.f32 %v192, %v184
    %v194 = vrot.slane %v193, 4
    %v195 = vadd.f32 %v193, %v194
    %v196 = vrot.slane %v195, 2
    %v197 = vadd.f32 %v195, %v196
    %v198 = vrot.slane %v197, 1
    %v199 = vadd.f32 %v197, %v198
    %v200 = vadd.f32 %v181, %v183
    %v201 = vadd.f32 %v200, %v185
    %v202 = vrot.slane %v201, 4
    %v203 = vadd.f32 %v201, %v202
    %v204 = vrot.slane %v203, 2
    %v205 = vadd.f32 %v203, %v204
    %v206 = vrot.slane %v205, 1
    %v207 = vadd.f32 %v205, %v206
    %v208 = vadd.f32 %v186, %v188
    %v209 = vadd.f32 %v208, %v190
    %v210 = vrot.slane %v209, 4
    %v211 = vadd.f32 %v209, %v210
    %v212 = vrot.slane %v211, 2
    %v213 = vadd.f32 %v211, %v212
    %v214 = vrot.slane %v213, 1
    %v215 = vadd.f32 %v213, %v214
    %v216 = vadd.f32 %v187, %v189
    %v217 = vadd.f32 %v216, %v191
    %v218 = vrot.slane %v217, 4
    %v219 = vadd.f32 %v217, %v218
    %v220 = vrot.slane %v219, 2
    %v221 = vadd.f32 %v219, %v220
    %v222 = vrot.slane %v221, 1
    %v223 = vadd.f32 %v221, %v222
    %v224 = vrcp.pop 24.0
    %v225 = vmul.f32 24.0, %v224
    %v226 = vsub.f32 1.0, %v225
    %v227 = vmul.f32 %v224, %v226
    %v228 = vadd.f32 %v224, %v227
    %vm229 = vweird.f32 %v224
    %v230 = vsel %vm229, %v224, %v228
    %v231 = vmul.f32 %v199, %v230
    %v232 = vmul.f32 %v207, %v230
    %v233 = vmul.f32 %v215, %v230
    %v234 = vmul.f32 %v223, %v230
    %v235 = vld [vmem:[%s4] sm:$0x1]
    %v237 = vperm.slane %v235, 0
    %v239 = vmul.f32 %v231, %v237
    %v240 = vmul.f32 %v233, %v237
    %v243 = vrot.slane %v240, 7
    %vm244 = vcmask 1041409
    %v245 = vsel %vm244, %v243, %v239
    %vm247 = vcmask 517120
    %v248 = vsel %vm247, %v245, 0.0
    %249 = vadd.xlane.f32.xlu0 %v248
    %v250 = vpop.xlane.xlu0 %249
    %v251 = vstv %s66
    %v252 = vadd.f32 %v250, %v251
    %v253 = vxor.u32 %v252, 2147483648
    %v254 = vmul.f32 %v253, 1.442695
    %v255 = vpow.pop %v254
    %v256 = vadd.f32 %v255, 1.0
    %v257 = vrcp.pop %v256
    %v258 = vmul.f32 %v256, %v257
    %v259 = vsub.f32 1.0, %v258
    %v260 = vmul.f32 %v257, %v259
    %v261 = vadd.f32 %v257, %v260
    %vm262 = vweird.f32 %v256
    %vm263 = vweird.f32 %v257
    %vm264 = vmor %vm262, %vm263
    %v265 = vsel %vm264, %v257, %v261
    %v266 = vand.u32 2147483647, %v256
    %vm267 = vcmp.eq.f32.partialorder %v266, 8.507059e+37
    %v268 = vand.u32 %v256, 2147483648
    %v269 = vor.u32 1.1754944e-38, %v268
    %v270 = vsel %vm267, %v269, %v265
    %v271 = vmul.f32 1.0, %v270
    %v273 = vperm.slane %v271, 0
    %v274 = vperm.slane %v271, 1
    %v277 = vmul.f32 %v273, %v180
    %v278 = vmul.f32 %v273, %v182
    %v279 = vmul.f32 %v273, %v184
    %v280 = vmul.f32 %v274, %v186
    %v281 = vmul.f32 %v274, %v188
    %v282 = vmul.f32 %v274, %v190
    %v283 = vadd.f32 %v277, 0.0
    %v284 = vadd.f32 %v278, 0.0
    %v285 = vadd.f32 %v279, 0.0
    %v286 = vadd.f32 %v280, 0.0
    %v287 = vadd.f32 %v281, 0.0
    %v288 = vadd.f32 %v282, 0.0
    %289 = vrot.lane.b32.xlu0 %v237, 64
    %v290 = vpop.permute.xlu0 %289
    %v292 = vmul.f32 %v231, %v290
    %v293 = vmul.f32 %v233, %v290
    %v296 = vrot.slane %v293, 7
    %v297 = vsel %vm244, %v296, %v292
    %298 = vrot.lane.b32.xlu0 %v297, 64
    %v299 = vpop.permute.xlu0 %298
    %v301 = vsel %vm247, %v299, 0.0
    %302 = vadd.xlane.f32.xlu0 %v301
    %v303 = vpop.xlane.xlu0 %302
    %v304 = vadd.f32 %v303, %v251
    %v305 = vxor.u32 %v304, 2147483648
    %v306 = vmul.f32 %v305, 1.442695
    %v307 = vpow.pop %v306
    %v308 = vadd.f32 %v307, 1.0
    %v309 = vrcp.pop %v308
    %v310 = vmul.f32 %v308, %v309
    %v311 = vsub.f32 1.0, %v310
    %v312 = vmul.f32 %v309, %v311
    %v313 = vadd.f32 %v309, %v312
    %vm314 = vweird.f32 %v308
    %vm315 = vweird.f32 %v309
    %vm316 = vmor %vm314, %vm315
    %v317 = vsel %vm316, %v309, %v313
    %v318 = vand.u32 2147483647, %v308
    %vm319 = vcmp.eq.f32.partialorder %v318, 8.507059e+37
    %v320 = vand.u32 %v308, 2147483648
    %v321 = vor.u32 1.1754944e-38, %v320
    %v322 = vsel %vm319, %v321, %v317
    %v323 = vmul.f32 1.0, %v322
    %v325 = vperm.slane %v323, 0
    %v326 = vperm.slane %v323, 1
    %v329 = vmul.f32 %v325, %v180
    %v330 = vmul.f32 %v325, %v182
    %v331 = vmul.f32 %v325, %v184
    %v332 = vmul.f32 %v326, %v186
    %v333 = vmul.f32 %v326, %v188
    %v334 = vmul.f32 %v326, %v190
    %341 = vrot.lane.b32.xlu0 %v329, 64
    %v342 = vpop.permute.xlu0 %341
    %343 = vrot.lane.b32.xlu0 %v330, 64
    %v344 = vpop.permute.xlu0 %343
    %345 = vrot.lane.b32.xlu0 %v331, 64
    %v346 = vpop.permute.xlu0 %345
    %347 = vrot.lane.b32.xlu0 %v332, 64
    %v348 = vpop.permute.xlu0 %347
    %349 = vrot.lane.b32.xlu0 %v333, 64
    %v350 = vpop.permute.xlu0 %349
    %351 = vrot.lane.b32.xlu0 %v334, 64
    %v352 = vpop.permute.xlu0 %351
    %v359 = vadd.f32 %v283, %v342
    %v360 = vadd.f32 %v284, %v344
    %v361 = vadd.f32 %v285, %v346
    %v362 = vadd.f32 %v286, %v348
    %v363 = vadd.f32 %v287, %v350
    %v364 = vadd.f32 %v288, %v352
    %v365 = vmul.f32 %v232, %v237
    %v366 = vmul.f32 %v234, %v237
    %v369 = vrot.slane %v366, 7
    %v370 = vsel %vm244, %v369, %v365
    %v372 = vsel %vm247, %v370, 0.0
    %373 = vadd.xlane.f32.xlu0 %v372
    %v374 = vpop.xlane.xlu0 %373
    %v375 = vadd.f32 %v374, %v251
    %v376 = vxor.u32 %v375, 2147483648
    %v377 = vmul.f32 %v376, 1.442695
    %v378 = vpow.pop %v377
    %v379 = vadd.f32 %v378, 1.0
    %v380 = vrcp.pop %v379
    %v381 = vmul.f32 %v379, %v380
    %v382 = vsub.f32 1.0, %v381
    %v383 = vmul.f32 %v380, %v382
    %v384 = vadd.f32 %v380, %v383
    %vm385 = vweird.f32 %v379
    %vm386 = vweird.f32 %v380
    %vm387 = vmor %vm385, %vm386
    %v388 = vsel %vm387, %v380, %v384
    %v389 = vand.u32 2147483647, %v379
    %vm390 = vcmp.eq.f32.partialorder %v389, 8.507059e+37
    %v391 = vand.u32 %v379, 2147483648
    %v392 = vor.u32 1.1754944e-38, %v391
    %v393 = vsel %vm390, %v392, %v388
    %v394 = vmul.f32 1.0, %v393
    %v396 = vperm.slane %v394, 0
    %v397 = vperm.slane %v394, 1
    %v400 = vmul.f32 %v396, %v181
    %v401 = vmul.f32 %v396, %v183
    %v402 = vmul.f32 %v396, %v185
    %v403 = vmul.f32 %v397, %v187
    %v404 = vmul.f32 %v397, %v189
    %v405 = vmul.f32 %v397, %v191
    %v406 = vadd.f32 %v359, %v400
    %v407 = vadd.f32 %v360, %v401
    %v408 = vadd.f32 %v361, %v402
    %v409 = vadd.f32 %v362, %v403
    %v410 = vadd.f32 %v363, %v404
    %v411 = vadd.f32 %v364, %v405
    %v412 = vmul.f32 %v232, %v290
    %v413 = vmul.f32 %v234, %v290
    %v416 = vrot.slane %v413, 7
    %v417 = vsel %vm244, %v416, %v412
    %418 = vrot.lane.b32.xlu0 %v417, 64
    %v419 = vpop.permute.xlu0 %418
    %v421 = vsel %vm247, %v419, 0.0
    %422 = vadd.xlane.f32.xlu0 %v421
    %v423 = vpop.xlane.xlu0 %422
    %v424 = vadd.f32 %v423, %v251
    %v425 = vxor.u32 %v424, 2147483648
    %v426 = vmul.f32 %v425, 1.442695
    %v427 = vpow.pop %v426
    %v428 = vadd.f32 %v427, 1.0
    %v429 = vrcp.pop %v428
    %v430 = vmul.f32 %v428, %v429
    %v431 = vsub.f32 1.0, %v430
    %v432 = vmul.f32 %v429, %v431
    %v433 = vadd.f32 %v429, %v432
    %vm434 = vweird.f32 %v428
    %vm435 = vweird.f32 %v429
    %vm436 = vmor %vm434, %vm435
    %v437 = vsel %vm436, %v429, %v433
    %v438 = vand.u32 2147483647, %v428
    %vm439 = vcmp.eq.f32.partialorder %v438, 8.507059e+37
    %v440 = vand.u32 %v428, 2147483648
    %v441 = vor.u32 1.1754944e-38, %v440
    %v442 = vsel %vm439, %v441, %v437
    %v443 = vmul.f32 1.0, %v442
    %v445 = vperm.slane %v443, 0
    %v446 = vperm.slane %v443, 1
    %v449 = vmul.f32 %v445, %v181
    %v450 = vmul.f32 %v445, %v183
    %v451 = vmul.f32 %v445, %v185
    %v452 = vmul.f32 %v446, %v187
    %v453 = vmul.f32 %v446, %v189
    %v454 = vmul.f32 %v446, %v191
    %461 = vrot.lane.b32.xlu0 %v449, 64
    %v462 = vpop.permute.xlu0 %461
    %463 = vrot.lane.b32.xlu0 %v450, 64
    %v464 = vpop.permute.xlu0 %463
    %465 = vrot.lane.b32.xlu0 %v451, 64
    %v466 = vpop.permute.xlu0 %465
    %467 = vrot.lane.b32.xlu0 %v452, 64
    %v468 = vpop.permute.xlu0 %467
    %469 = vrot.lane.b32.xlu0 %v453, 64
    %v470 = vpop.permute.xlu0 %469
    %471 = vrot.lane.b32.xlu0 %v454, 64
    %v472 = vpop.permute.xlu0 %471
    %v479 = vadd.f32 %v406, %v462
    %v480 = vadd.f32 %v407, %v464
    %v481 = vadd.f32 %v408, %v466
    %v482 = vadd.f32 %v409, %v468
    %v483 = vadd.f32 %v410, %v470
    %v484 = vadd.f32 %v411, %v472
    %v485 = vld [vmem:[#allocation6] sm:$0xff]
    %v486 = vld [vmem:[#allocation6 + $0x8] sm:$0xff]
    %v487 = vld [vmem:[#allocation6 + $0x10] sm:$0xff]
    %v488 = vld [vmem:[#allocation6 + $0x18] sm:$0xff]
    %v489 = vld [vmem:[#allocation6 + $0x20] sm:$0xff]
    %v490 = vld [vmem:[#allocation6 + $0x28] sm:$0xff]
    %v491 = vld [vmem:[#allocation6 + $0x30] sm:$0xff]
    %v492 = vld [vmem:[#allocation6 + $0x38] sm:$0xff]
    %v493 = vld [vmem:[%s6] sm:$0x1]
    %v495 = vperm.slane %v493, 0
    %vm497 = vcmask 523264
    %v499 = vsel %vm497, %v479, 0
    %v502 = vsel %vm497, %v480, 0
    %v505 = vsel %vm497, %v481, 0
    %v508 = vsel %vm497, %v482, 0
    %v511 = vsel %vm497, %v483, 0
    %v514 = vsel %vm497, %v484, 0
    %516 = vmatpush.msra.mxu0 0.0
    %517 = vmatpush.msra.mxu0 0.0
    %518 = vmatpush.msra.mxu0 0.0
    %519 = vmatpush.msra.mxu0 0.0
    %520 = vmatpush.msra.mxu0 0.0
    %521 = vmatpush.msra.mxu0 0.0
    %522 = vmatpush.msra.mxu0 0.0
    %523 = vmatpush.msra.mxu0 0.0
    %524 = vmatpush.msra.mxu0 %v492
    %525 = vmatpush.msra.mxu0 %v491
    %526 = vmatpush.msra.mxu0 %v490
    %527 = vmatpush.msra.mxu0 %v489
    %528 = vmatpush.msra.mxu0 %v488
    %529 = vmatpush.msra.mxu0 %v487
    %530 = vmatpush.msra.mxu0 %v486
    %531 = vmatpush.msra.mxu0 %v485
    %532 = vmatmul.f32.gmra.mxu0 %v499
    %v533 = vpop.f32.mrf.mxu0
    %v534 = vadd.f32 %v495, %v533
    %535 = vmatmul.f32.gmra.mxu0 %v502
    %v536 = vpop.f32.mrf.mxu0
    %v537 = vadd.f32 %v495, %v536
    %538 = vmatmul.f32.gmra.mxu0 %v505
    %v539 = vpop.f32.mrf.mxu0
    %v540 = vadd.f32 %v495, %v539
    %541 = vmatmul.f32.gmra.mxu0 %v508
    %v542 = vpop.f32.mrf.mxu0
    %v543 = vadd.f32 %v495, %v542
    %544 = vmatmul.f32.gmra.mxu0 %v511
    %v545 = vpop.f32.mrf.mxu0
    %v546 = vadd.f32 %v495, %v545
    %547 = vmatmul.f32.gmra.mxu0 %v514
    %v548 = vpop.f32.mrf.mxu0
    %v549 = vadd.f32 %v495, %v548
    %550 = vdwg.mxu0
    %vm551 = vcmask 261120
    %v552 = vsel %vm551, %v534, 0.0
    %v553 = vsel %vm551, %v537, 0.0
    %v554 = vadd.f32 %v552, %v553
    %v555 = vsel %vm551, %v540, 0.0
    %v556 = vadd.f32 %v554, %v555
    %v557 = vsel %vm551, %v543, 0.0
    %v558 = vadd.f32 %v556, %v557
    %v559 = vsel %vm551, %v546, 0.0
    %v560 = vadd.f32 %v558, %v559
    %v561 = vsel %vm551, %v549, 0.0
    %v562 = vadd.f32 %v560, %v561
    %563 = vadd.xlane.f32.xlu0 %v562
    %v564 = vpop.xlane.xlu0 %563
    %v565 = vrot.slane %v564, 4
    %v566 = vadd.f32 %v564, %v565
    %v567 = vrot.slane %v566, 2
    %v568 = vadd.f32 %v566, %v567
    %v569 = vrot.slane %v568, 1
    %v570 = vadd.f32 %v568, %v569
    %s571 = vtos %v570
    %v572 = vrcp.pop 1536.0
    %v573 = vmul.f32 1536.0, %v572
    %v574 = vsub.f32 1.0, %v573
    %v575 = vmul.f32 %v572, %v574
    %v576 = vadd.f32 %v572, %v575
    %vm577 = vweird.f32 %v572
    %v578 = vsel %vm577, %v572, %v576
    %s579 = vtos %v578
    %s580 = smul.f32 %s571, %s579
    %v581 = vstv %s580
    %v582 = vsub.f32 %v534, %v581
    %v583 = vsub.f32 %v537, %v581
    %v584 = vsub.f32 %v540, %v581
    %v585 = vsub.f32 %v543, %v581
    %v586 = vsub.f32 %v546, %v581
    %v587 = vsub.f32 %v549, %v581
    %v588 = vmul.f32 %v582, %v582
    %v589 = vmul.f32 %v583, %v583
    %v590 = vmul.f32 %v584, %v584
    %v591 = vmul.f32 %v585, %v585
    %v592 = vmul.f32 %v586, %v586
    %v593 = vmul.f32 %v587, %v587
    %v594 = vsel %vm551, %v588, 0.0
    %v595 = vsel %vm551, %v589, 0.0
    %v596 = vadd.f32 %v594, %v595
    %v597 = vsel %vm551, %v590, 0.0
    %v598 = vadd.f32 %v596, %v597
    %v599 = vsel %vm551, %v591, 0.0
    %v600 = vadd.f32 %v598, %v599
    %v601 = vsel %vm551, %v592, 0.0
    %v602 = vadd.f32 %v600, %v601
    %v603 = vsel %vm551, %v593, 0.0
    %v604 = vadd.f32 %v602, %v603
    %605 = vadd.xlane.f32.xlu0 %v604
    %v606 = vpop.xlane.xlu0 %605
    %v607 = vrot.slane %v606, 4
    %v608 = vadd.f32 %v606, %v607
    %v609 = vrot.slane %v608, 2
    %v610 = vadd.f32 %v608, %v609
    %v611 = vrot.slane %v610, 1
    %v612 = vadd.f32 %v610, %v611
    %s613 = vtos %v612
    %v614 = vrcp.pop 1536.0
    %v615 = vmul.f32 1536.0, %v614
    %v616 = vsub.f32 1.0, %v615
    %v617 = vmul.f32 %v614, %v616
    %v618 = vadd.f32 %v614, %v617
    %vm619 = vweird.f32 %v614
    %v620 = vsel %vm619, %v614, %v618
    %s621 = vtos %v620
    %s622 = smul.f32 %s613, %s621
    %s623 = sadd.f32 %s622, 1e-05
    %v624 = vstv %s623
    %v625 = vrsqrt.pop %v624
    %v626 = vmul.f32 %v625, %v624
    %v627 = vmul.f32 %v626, %v625
    %v628 = vmul.f32 0.5, %v627
    %v629 = vsub.f32 1.5, %v628
    %v630 = vmul.f32 %v625, %v629
    %vm631 = vweird.f32 %v624
    %vm632 = vweird.f32 %v625
    %vm633 = vmor %vm631, %vm632
    %v634 = vsel %vm633, %v625, %v630
    %s635 = vtos %v634
    %v636 = vstv %s635
    %v637 = vmul.f32 %v582, %v636
    %v638 = vmul.f32 %v583, %v636
    %v639 = vmul.f32 %v584, %v636
    %v640 = vmul.f32 %v585, %v636
    %v641 = vmul.f32 %v586, %v636
    %v642 = vmul.f32 %v587, %v636
    %v643 = vstv %s67
    %v644 = vmul.f32 %v637, %v643
    %v645 = vmul.f32 %v638, %v643
    %v646 = vmul.f32 %v639, %v643
    %v647 = vmul.f32 %v640, %v643
    %v648 = vmul.f32 %v641, %v643
    %v649 = vmul.f32 %v642, %v643
    %v650 = vstv %s68
    %v651 = vadd.f32 %v644, %v650
    %v652 = vadd.f32 %v645, %v650
    %v653 = vadd.f32 %v646, %v650
    %v654 = vadd.f32 %v647, %v650
    %v655 = vadd.f32 %v648, %v650
    %v656 = vadd.f32 %v649, %v650
    %vm657 = vcmp.gt.f32.partialorder %v651, 0.0
    %vm658 = vcmp.gt.f32.partialorder %v652, 0.0
    %vm659 = vcmp.gt.f32.partialorder %v653, 0.0
    %vm660 = vcmp.gt.f32.partialorder %v654, 0.0
    %vm661 = vcmp.gt.f32.partialorder %v655, 0.0
    %vm662 = vcmp.gt.f32.partialorder %v656, 0.0
    %v663 = vmul.f32 %v651, 1.442695
    %v664 = vpow.pop %v663
    %v665 = vmul.f32 %v652, 1.442695
    %v666 = vpow.pop %v665
    %v667 = vmul.f32 %v653, 1.442695
    %v668 = vpow.pop %v667
    %v669 = vmul.f32 %v654, 1.442695
    %v670 = vpow.pop %v669
    %v671 = vmul.f32 %v655, 1.442695
    %v672 = vpow.pop %v671
    %v673 = vmul.f32 %v656, 1.442695
    %v674 = vpow.pop %v673
    %v675 = vsub.f32 %v664, 1.0
    %v676 = vsub.f32 %v666, 1.0
    %v677 = vsub.f32 %v668, 1.0
    %v678 = vsub.f32 %v670, 1.0
    %v679 = vsub.f32 %v672, 1.0
    %v680 = vsub.f32 %v674, 1.0
    %v681 = vmul.f32 %v675, 1.6732632
    %v682 = vmul.f32 %v676, 1.6732632
    %v683 = vmul.f32 %v677, 1.6732632
    %v684 = vmul.f32 %v678, 1.6732632
    %v685 = vmul.f32 %v679, 1.6732632
    %v686 = vmul.f32 %v680, 1.6732632
    %v687 = vsel %vm657, %v651, %v681
    %v688 = vsel %vm658, %v652, %v682
    %v689 = vsel %vm659, %v653, %v683
    %v690 = vsel %vm660, %v654, %v684
    %v691 = vsel %vm661, %v655, %v685
    %v692 = vsel %vm662, %v656, %v686
    %v693 = vmul.f32 %v687, 1.050701
    %v694 = vmul.f32 %v688, 1.050701
    %v695 = vmul.f32 %v689, 1.050701
    %v696 = vmul.f32 %v690, 1.050701
    %v697 = vmul.f32 %v691, 1.050701
    %v698 = vmul.f32 %v692, 1.050701
    %v699 = vld [vmem:[%s7] sm:$0x1]
    %v701 = vperm.slane %v699, 0
    %v703 = vmul.f32 %v693, %v701
    %v704 = vmul.f32 %v694, %v701
    %v705 = vmul.f32 %v695, %v701
    %v706 = vmul.f32 %v696, %v701
    %v707 = vmul.f32 %v697, %v701
    %v708 = vmul.f32 %v698, %v701
    %v709 = vsel %vm551, %v703, 0.0
    %710 = vadd.xlane.f32.xlu0 %v709
    %v711 = vpop.xlane.xlu0 %710
    %v712 = vsel %vm551, %v704, 0.0
    %713 = vadd.xlane.f32.xlu0 %v712
    %v714 = vpop.xlane.xlu0 %713
    %v715 = vsel %vm551, %v705, 0.0
    %716 = vadd.xlane.f32.xlu0 %v715
    %v717 = vpop.xlane.xlu0 %716
    %v718 = vsel %vm551, %v706, 0.0
    %719 = vadd.xlane.f32.xlu0 %v718
    %v720 = vpop.xlane.xlu0 %719
    %v721 = vsel %vm551, %v707, 0.0
    %722 = vadd.xlane.f32.xlu0 %v721
    %v723 = vpop.xlane.xlu0 %722
    %v724 = vsel %vm551, %v708, 0.0
    %725 = vadd.xlane.f32.xlu0 %v724
    %v726 = vpop.xlane.xlu0 %725
    %v727 = vstv %s69
    %v728 = vadd.f32 %v711, %v727
    %v729 = vadd.f32 %v714, %v727
    %v730 = vadd.f32 %v717, %v727
    %v731 = vadd.f32 %v720, %v727
    %v732 = vadd.f32 %v723, %v727
    %v733 = vadd.f32 %v726, %v727
    %v734 = vmax.f32 %v728, %v730
    %v735 = vmax.f32 %v734, %v729
    %v736 = vrot.slane %v735, 4
    %v737 = vmax.f32 %v735, %v736
    %v738 = vrot.slane %v737, 2
    %v739 = vmax.f32 %v737, %v738
    %v740 = vrot.slane %v739, 1
    %v741 = vmax.f32 %v739, %v740
    %v742 = vmax.f32 %v731, %v733
    %v743 = vmax.f32 %v742, %v732
    %v744 = vrot.slane %v743, 4
    %v745 = vmax.f32 %v743, %v744
    %v746 = vrot.slane %v745, 2
    %v747 = vmax.f32 %v745, %v746
    %v748 = vrot.slane %v747, 1
    %v749 = vmax.f32 %v747, %v748
    %v750 = vsub.f32 %v728, %v741
    %v751 = vsub.f32 %v729, %v741
    %v752 = vsub.f32 %v730, %v741
    %v753 = vsub.f32 %v731, %v749
    %v754 = vsub.f32 %v732, %v749
    %v755 = vsub.f32 %v733, %v749
    %v756 = vmul.f32 %v750, 1.442695
    %v757 = vpow.pop %v756
    %v758 = vmul.f32 %v751, 1.442695
    %v759 = vpow.pop %v758
    %v760 = vmul.f32 %v752, 1.442695
    %v761 = vpow.pop %v760
    %v762 = vmul.f32 %v753, 1.442695
    %v763 = vpow.pop %v762
    %v764 = vmul.f32 %v754, 1.442695
    %v765 = vpow.pop %v764
    %v766 = vmul.f32 %v755, 1.442695
    %v767 = vpow.pop %v766
    %v768 = vadd.f32 %v757, %v759
    %v769 = vadd.f32 %v768, %v761
    %v770 = vrot.slane %v769, 4
    %v771 = vadd.f32 %v769, %v770
    %v772 = vrot.slane %v771, 2
    %v773 = vadd.f32 %v771, %v772
    %v774 = vrot.slane %v773, 1
    %v775 = vadd.f32 %v773, %v774
    %v776 = vadd.f32 %v763, %v765
    %v777 = vadd.f32 %v776, %v767
    %v778 = vrot.slane %v777, 4
    %v779 = vadd.f32 %v777, %v778
    %v780 = vrot.slane %v779, 2
    %v781 = vadd.f32 %v779, %v780
    %v782 = vrot.slane %v781, 1
    %v783 = vadd.f32 %v781, %v782
    %v784 = vrcp.pop %v775
    %v785 = vrcp.pop %v783
    %v786 = vmul.f32 %v757, %v784
    %v787 = vmul.f32 %v759, %v784
    %v788 = vmul.f32 %v761, %v784
    %v789 = vmul.f32 %v763, %v785
    %v790 = vmul.f32 %v765, %v785
    %v791 = vmul.f32 %v767, %v785
    %v792 = vmul.f32 %v786, %v693
    %v793 = vmul.f32 %v787, %v694
    %v794 = vmul.f32 %v788, %v695
    %v795 = vmul.f32 %v789, %v696
    %v796 = vmul.f32 %v790, %v697
    %v797 = vmul.f32 %v791, %v698
    %v798 = vsel %vm551, %v792, 0.0
    %v799 = vsel %vm551, %v793, 0.0
    %v800 = vadd.f32 %v798, %v799
    %v801 = vsel %vm551, %v794, 0.0
    %v802 = vadd.f32 %v800, %v801
    %v803 = vrot.slane %v802, 4
    %v804 = vadd.f32 %v802, %v803
    %v805 = vrot.slane %v804, 2
    %v806 = vadd.f32 %v804, %v805
    %v807 = vrot.slane %v806, 1
    %v808 = vadd.f32 %v806, %v807
    %v809 = vsel %vm551, %v795, 0.0
    %v810 = vsel %vm551, %v796, 0.0
    %v811 = vadd.f32 %v809, %v810
    %v812 = vsel %vm551, %v797, 0.0
    %v813 = vadd.f32 %v811, %v812
    %v814 = vrot.slane %v813, 4
    %v815 = vadd.f32 %v813, %v814
    %v816 = vrot.slane %v815, 2
    %v817 = vadd.f32 %v815, %v816
    %v818 = vrot.slane %v817, 1
    %v819 = vadd.f32 %v817, %v818
    %v820 = vld [vmem:[%s8] sm:$0x3]
    %v821 = vmul.f32 %v808, %v820
    %v822 = vmul.f32 %v819, %v820
    %vm823 = vcmask 254976
    %v824 = vsel %vm823, %v821, 0.0
    %825 = vadd.xlane.f32.xlu0 %v824
    %v826 = vpop.xlane.xlu0 %825
    %v827 = vsel %vm823, %v822, 0.0
    %828 = vadd.xlane.f32.xlu0 %v827
    %v829 = vpop.xlane.xlu0 %828
    %v830 = vld [vmem:[%s9] sm:$0x1]
    %v832 = vperm.slane %v830, 0
    %v833 = vlaneseq
    %v834 = vshrl.u32 %v833, 7
    %836 = vset.pattern.permute.xlu0 %v834
    %837 = vperm.xlu0 %836, %v832
    %v838 = vpop.permute.xlu0 %837
    %v840 = vadd.f32 %v826, %v838
    %v841 = vadd.f32 %v829, %v838
    %844 = vset.pattern.permute.xlu0 0
    %845 = vperm.xlu0 %844, %v840
    %v846 = vpop.permute.xlu0 %845
    %847 = vset.pattern.permute.xlu0 0
    %848 = vperm.xlu0 %847, %v841
    %v849 = vpop.permute.xlu0 %848
    %v850 = vlaneseq
    %v851 = vand.u32 %v850, 127
    %v852 = vperm.slane %v846, %v851
    %v853 = vperm.slane %v849, %v851
    %v854 = vsel %vm244, %v853, %v852
    %vm856 = vcmask 9216
    %857 = vst.msk [vmem:[#allocation7] sm:$0x3] %vm856, %v854
    // Predicated region
    $region50: #{_lambda_.1} parent=1 // pred_check
      _
    $region51: #{_lambda_.1} parent=1 // pred_check_branch
      %859 = sbr.rel (0) target = $region53
    $region52: #{_lambda_.1} parent=1 // pred_region
      %861 = vsyncadd [#allocation4], 0
      %s863 = sshll.u32 [#allocation7], 4
      %s864 = int_to_ptr.vmem [resolvable:$true] %s863
      %s865 = sshll.u32 %s10, 4
      %s866 = int_to_ptr.hbm [resolvable:$true] %s865
      %868 = dma.vmem_to_hbm [thread:$0]  %s864, 32, %s866, [#allocation4]
    $region53: #{_lambda_.1} parent=1 // pred_fallthru
      _
    // Predicated region
    $region54: #{_lambda_.1} parent=1 // pred_check
      _
    $region55: #{_lambda_.1} parent=1 // pred_check_branch
      %870 = sbr.rel (0) target = $region57
    $region56: #{_lambda_.1} parent=1 // pred_region
      %872 = dma.done [#allocation4], 32
    $region57: #{_lambda_.1} parent=1 // pred_fallthru
      _
    %873 = vsyncpa [#allocation3], 1
    %874 = vsyncpa [#allocation4], 1
    %875 = vsyncpa [#allocation5], 1

</llo_original>
